<compile_context>
chip_gen: v5e
topology: v5e:2x2
jax: 0.10.0
libtpu: 0.0.40
codegen_flags: <defaults>
</compile_context>

<pallas_src>
import math
from functools import partial

import jax
import jax.numpy as jnp
from jax.experimental import pallas as pl
from jax.experimental.pallas import tpu as pltpu

_INV_SQRT2 = 1.0 / math.sqrt(2.0)


def _gelu_exact(x):
    # PyTorch nn.GELU() default: exact erf-based GELU.
    return 0.5 * x * (1.0 + jax.lax.erf(x * _INV_SQRT2))


def flow_mlp_kernel(t_ref, x_ref, w1t_ref, w1x_ref, b1_ref,
                    w2_ref, b2_ref, w3_ref, b3_ref, w4_ref, b4_ref,
                    out_ref):
    # Layer 1 (transposed): (cat([t, x], -1) @ W1)^T == W1x^T @ x^T + W1t^T * t^T + b1^T
    h = (jnp.dot(w1x_ref[...], x_ref[...], preferred_element_type=jnp.float32)
         + w1t_ref[...] * t_ref[...]
         + b1_ref[...])
    h = _gelu_exact(h)
    h = jnp.dot(w2_ref[...], h, preferred_element_type=jnp.float32) + b2_ref[...]
    h = _gelu_exact(h)
    h = jnp.dot(w3_ref[...], h, preferred_element_type=jnp.float32) + b3_ref[...]
    h = _gelu_exact(h)
    out = jnp.dot(w4_ref[...], h, preferred_element_type=jnp.float32) + b4_ref[...]
    out_ref[...] = out.astype(out_ref.dtype)


def _round_up(x, m):
    return ((x + m - 1) // m) * m


def _tpu_vmem_and_multicore():
    """Per-generation VMEM capacity and a multi-TensorCore (v7x) heuristic.

    Everything is best-effort with conservative fallbacks; correctness does not
    depend on the answer, only tiling does.
    """
    vmem_cap = 64 << 20          # conservative fallback (v7x per-TC physical)
    multicore = False
    try:
        cap = getattr(pltpu.get_tpu_info(), "vmem_capacity_bytes", None)
        if cap:
            vmem_cap = int(cap)
    except Exception:
        pass
    try:
        multicore = "v7" in jax.devices()[0].device_kind.lower()
    except Exception:
        pass
    return vmem_cap, multicore


def _choose_tile(B, x_dim, hidden, out_dim, multicore, vmem_budget, max_tile):
    """Batch (lane-axis) tile size.

    Single-TC parts (v5e/v6e): one full-extent tile whenever it fits (grid is a
    serial loop; extra steps cost ~0.35us each for nothing).
    Multi-TC parts (v7x): >= 2 grid steps, even step count, 128-multiple tiles.
    """
    def su(n):                              # sublane-padded row count
        return _round_up(max(n, 1), 8)

    def tile_bytes(tile):
        io = (su(1) + su(x_dim) + su(out_dim)) * tile * 4 * 2       # dbl-buffered t/x/out
        mid = su(hidden) * tile * 4 * 2                             # live f32 intermediates
        wts = (su(hidden) * _round_up(x_dim + 1, 128)
               + 2 * su(hidden) * _round_up(hidden, 128)
               + su(out_dim) * _round_up(hidden, 128)
               + (3 * su(hidden) + su(out_dim)) * 128) * 4 * 2      # dbl-buffered weights
        return io + mid + wts

    if (not multicore) and B <= max_tile and tile_bytes(_round_up(B, 128)) <= vmem_budget:
        return B                             # full-extent block, grid == 1

    steps = max(2 if multicore else 1, pl.cdiv(B, max_tile))
    if multicore and steps % 2:
        steps += 1                           # even step count -> both TCs stay busy
    tile = _round_up(pl.cdiv(B, steps), 128)
    tile = min(tile, _round_up(max_tile, 128))
    while tile > 128 and tile_bytes(tile) > vmem_budget:
        tile -= 128
    return max(tile, 128)


@partial(jax.jit, static_argnames=("max_tile",))
def flow_forward(x_t, t, params, max_tile=2048):
    """FlowModel.forward: net(cat([t, x_t], -1)) as a single Pallas kernel."""
    w1, b1, w2, b2, w3, b3, w4, b4 = params
    B, x_dim = x_t.shape
    hidden = w1.shape[1]
    out_dim = w4.shape[1]

    vmem_cap, multicore = _tpu_vmem_and_multicore()
    vmem_limit = int(min(max(vmem_cap * 3 // 4, 32 << 20), 64 << 20))
    tile = _choose_tile(B, x_dim, hidden, out_dim, multicore, vmem_limit // 2, max_tile)
    grid = (pl.cdiv(B, tile),)

    # Transposed (lane == batch) operands; weight transposes are tiny (<= HxH).
    x_T = x_t.T                              # (x_dim, B)
    t_T = t.T                                # (1, B)
    w1_T = w1.T                              # (hidden, x_dim + 1)
    w1t, w1x = w1_T[:, :1], w1_T[:, 1:]      # (hidden, 1), (hidden, x_dim)
    w2_T, w3_T, w4_T = w2.T, w3.T, w4.T
    b1c, b2c, b3c, b4c = b1.T, b2.T, b3.T, b4.T   # (features, 1)

    def batch_spec(rows):
        return pl.BlockSpec((rows, tile), lambda i: (0, i))

    def full_spec(arr):
        return pl.BlockSpec(arr.shape, lambda i: (0, 0))

    out_T = pl.pallas_call(
        flow_mlp_kernel,
        out_shape=jax.ShapeDtypeStruct((out_dim, B), x_t.dtype),
        grid_spec=pltpu.PrefetchScalarGridSpec(
            num_scalar_prefetch=0,
            grid=grid,
            in_specs=[
                batch_spec(1),               # t^T
                batch_spec(x_dim),           # x^T
                full_spec(w1t), full_spec(w1x), full_spec(b1c),
                full_spec(w2_T), full_spec(b2c),
                full_spec(w3_T), full_spec(b3c),
                full_spec(w4_T), full_spec(b4c),
            ],
            out_specs=batch_spec(out_dim),
        ),
        compiler_params=pltpu.CompilerParams(
            dimension_semantics=("parallel",),
            vmem_limit_bytes=vmem_limit),
    )(t_T, x_T, w1t, w1x, b1c, w2_T, b2c, w3_T, b3c, w4_T, b4c)

    return out_T.T


def init_params(key, x_dim, hidden_dim, dtype=jnp.float32):
    """Deterministic PyTorch-style (Kaiming-uniform-ish) Linear init.

    Weights stored as [in_features, out_features] so y = x @ W + b
    (equivalent to PyTorch's x @ W.T with W of shape [out, in]).
    """
    def linear(key, fan_in, fan_out):
        kw, kb = jax.random.split(key)
        bound = 1.0 / math.sqrt(fan_in)
        w = jax.random.uniform(kw, (fan_in, fan_out), dtype, minval=-bound, maxval=bound)
        b = jax.random.uniform(kb, (1, fan_out), dtype, minval=-bound, maxval=bound)
        return w, b

    k1, k2, k3, k4 = jax.random.split(key, 4)
    w1, b1 = linear(k1, x_dim + 1, hidden_dim)
    w2, b2 = linear(k2, hidden_dim, hidden_dim)
    w3, b3 = linear(k3, hidden_dim, hidden_dim)
    w4, b4 = linear(k4, hidden_dim, x_dim)
    return (w1, b1, w2, b2, w3, b3, w4, b4)


def flow_forward_ref(x_t, t, params):
    w1, b1, w2, b2, w3, b3, w4, b4 = params
    h = jnp.concatenate([t, x_t], axis=-1)
    h = _gelu_exact(h @ w1 + b1)
    h = _gelu_exact(h @ w2 + b2)
    h = _gelu_exact(h @ w3 + b3)
    return h @ w4 + b4


if __name__ == "__main__":
    # TODO(synk): sample()/inverse_sample()/log_likelihood() rely on
    # torchdiffeq.odeint + autograd divergence and are out of scope; only
    # forward() is implemented as a Pallas kernel.
    x_dim, hidden_dim = 2, 32
    key = jax.random.PRNGKey(0)
    k_params, k_x, k_t = jax.random.split(key, 3)
    params = init_params(k_params, x_dim, hidden_dim)

    # Small case (single full-extent tile).
    batch = 8
    x_t = jax.random.normal(k_x, (batch, x_dim), jnp.float32)
    t = jax.random.uniform(k_t, (batch, 1), jnp.float32)
    out = jax.block_until_ready(flow_forward(x_t, t, params))
    ref = flow_forward_ref(x_t, t, params)
    assert out.shape == (batch, x_dim)
    assert jnp.allclose(out, ref, atol=1e-5, rtol=1e-5), "mismatch vs reference (small)"

    # Non-divisible batch with a forced small tile: exercises the multi-step
    # grid and the masked boundary block (200 = 128 + 72, pad columns masked).
    batch2 = 200
    x_t2 = jax.random.normal(k_x, (batch2, x_dim), jnp.float32)
    t2 = jax.random.uniform(k_t, (batch2, 1), jnp.float32)
    out2 = jax.block_until_ready(flow_forward(x_t2, t2, params, max_tile=128))
    ref2 = flow_forward_ref(x_t2, t2, params)
    assert out2.shape == (batch2, x_dim)
    assert jnp.allclose(out2, ref2, atol=1e-5, rtol=1e-5), "mismatch vs reference (tiled/masked)"

    # Same batch with default tiling (single full-extent tile on 1-TC parts).
    out3 = jax.block_until_ready(flow_forward(x_t2, t2, params))
    assert jnp.allclose(out3, ref2, atol=1e-5, rtol=1e-5), "mismatch vs reference (default tile)"

    print("KERNEL_OK")
</pallas_src>

<mosaic_0001>
module attributes {stable_mosaic.version = 11 : i64} {
  func.func @flow_mlp_kernel(%arg0: i32, %arg1: memref<1x8xf32, #tpu.memory_space<vmem>>, %arg2: memref<2x8xf32, #tpu.memory_space<vmem>>, %arg3: memref<32x1xf32, #tpu.memory_space<vmem>>, %arg4: memref<32x2xf32, #tpu.memory_space<vmem>>, %arg5: memref<32x1xf32, #tpu.memory_space<vmem>>, %arg6: memref<32x32xf32, #tpu.memory_space<vmem>>, %arg7: memref<32x1xf32, #tpu.memory_space<vmem>>, %arg8: memref<32x32xf32, #tpu.memory_space<vmem>>, %arg9: memref<32x1xf32, #tpu.memory_space<vmem>>, %arg10: memref<2x32xf32, #tpu.memory_space<vmem>>, %arg11: memref<2x1xf32, #tpu.memory_space<vmem>>, %arg12: memref<2x8xf32, #tpu.memory_space<vmem>>) attributes {dimension_semantics = [#tpu.dimension_semantics<parallel>], iteration_bounds = array<i64: 1>, scalar_prefetch = 0 : i64, scratch_operands = 0 : i64, tpu.core_type = #tpu.core_type<tc>, window_params = [{transform_indices = @transform_0, window_bounds = array<i64: 1, 8>}, {transform_indices = @transform_1, window_bounds = array<i64: 2, 8>}, {pipeline_mode = #tpu.pipeline_mode<synchronous>, transform_indices = @transform_2, window_bounds = array<i64: 32, 1>}, {pipeline_mode = #tpu.pipeline_mode<synchronous>, transform_indices = @transform_3, window_bounds = array<i64: 32, 2>}, {pipeline_mode = #tpu.pipeline_mode<synchronous>, transform_indices = @transform_4, window_bounds = array<i64: 32, 1>}, {pipeline_mode = #tpu.pipeline_mode<synchronous>, transform_indices = @transform_5, window_bounds = array<i64: 32, 32>}, {pipeline_mode = #tpu.pipeline_mode<synchronous>, transform_indices = @transform_6, window_bounds = array<i64: 32, 1>}, {pipeline_mode = #tpu.pipeline_mode<synchronous>, transform_indices = @transform_7, window_bounds = array<i64: 32, 32>}, {pipeline_mode = #tpu.pipeline_mode<synchronous>, transform_indices = @transform_8, window_bounds = array<i64: 32, 1>}, {pipeline_mode = #tpu.pipeline_mode<synchronous>, transform_indices = @transform_9, window_bounds = array<i64: 2, 32>}, {pipeline_mode = #tpu.pipeline_mode<synchronous>, transform_indices = @transform_10, window_bounds = array<i64: 2, 1>}, {transform_indices = @transform_11, window_bounds = array<i64: 2, 8>}]} {
    %c0 = arith.constant 0 : index
    %c0_0 = arith.constant 0 : index
    %0 = vector.load %arg4[%c0, %c0_0] : memref<32x2xf32, #tpu.memory_space<vmem>>, vector<32x2xf32>
    %c0_1 = arith.constant 0 : index
    %c0_2 = arith.constant 0 : index
    %1 = vector.load %arg2[%c0_1, %c0_2] : memref<2x8xf32, #tpu.memory_space<vmem>>, vector<2x8xf32>
    %cst = arith.constant dense<0.000000e+00> : vector<32x8xf32>
    %2 = tpu.matmul %0, %1, %cst {dimension_numbers = #tpu.dot_dimension_numbers<[1], [0], [0], [1], [0, 0, 1, 1], [], []>} : vector<32x2xf32>, vector<2x8xf32>, vector<32x8xf32> -> vector<32x8xf32>
    %c0_3 = arith.constant 0 : index
    %c0_4 = arith.constant 0 : index
    %3 = vector.load %arg3[%c0_3, %c0_4] : memref<32x1xf32, #tpu.memory_space<vmem>>, vector<32x1xf32>
    %c0_5 = arith.constant 0 : index
    %c0_6 = arith.constant 0 : index
    %4 = vector.load %arg1[%c0_5, %c0_6] : memref<1x8xf32, #tpu.memory_space<vmem>>, vector<1x8xf32>
    %5 = vector.broadcast %3 : vector<32x1xf32> to vector<32x8xf32>
    %6 = vector.broadcast %4 : vector<1x8xf32> to vector<32x8xf32>
    %7 = arith.mulf %5, %6 : vector<32x8xf32>
    %8 = arith.addf %2, %7 : vector<32x8xf32>
    %c0_7 = arith.constant 0 : index
    %c0_8 = arith.constant 0 : index
    %9 = vector.load %arg5[%c0_7, %c0_8] : memref<32x1xf32, #tpu.memory_space<vmem>>, vector<32x1xf32>
    %10 = vector.broadcast %9 : vector<32x1xf32> to vector<32x8xf32>
    %11 = arith.addf %8, %10 : vector<32x8xf32>
    %cst_9 = arith.constant 5.000000e-01 : f32
    %12 = vector.broadcast %cst_9 : f32 to vector<32x8xf32>
    %13 = arith.mulf %12, %11 : vector<32x8xf32>
    %cst_10 = arith.constant 0.707106769 : f32
    %14 = vector.broadcast %cst_10 : f32 to vector<32x8xf32>
    %15 = arith.mulf %11, %14 : vector<32x8xf32>
    %16 = math.erf %15 : vector<32x8xf32>
    %cst_11 = arith.constant 1.000000e+00 : f32
    %17 = vector.broadcast %cst_11 : f32 to vector<32x8xf32>
    %18 = arith.addf %17, %16 : vector<32x8xf32>
    %19 = arith.mulf %13, %18 : vector<32x8xf32>
    %c0_12 = arith.constant 0 : index
    %c0_13 = arith.constant 0 : index
    %20 = vector.load %arg6[%c0_12, %c0_13] : memref<32x32xf32, #tpu.memory_space<vmem>>, vector<32x32xf32>
    %cst_14 = arith.constant dense<0.000000e+00> : vector<32x8xf32>
    %21 = tpu.matmul %20, %19, %cst_14 {dimension_numbers = #tpu.dot_dimension_numbers<[1], [0], [0], [1], [0, 0, 1, 1], [], []>} : vector<32x32xf32>, vector<32x8xf32>, vector<32x8xf32> -> vector<32x8xf32>
    %c0_15 = arith.constant 0 : index
    %c0_16 = arith.constant 0 : index
    %22 = vector.load %arg7[%c0_15, %c0_16] : memref<32x1xf32, #tpu.memory_space<vmem>>, vector<32x1xf32>
    %23 = vector.broadcast %22 : vector<32x1xf32> to vector<32x8xf32>
    %24 = arith.addf %21, %23 : vector<32x8xf32>
    %cst_17 = arith.constant 5.000000e-01 : f32
    %25 = vector.broadcast %cst_17 : f32 to vector<32x8xf32>
    %26 = arith.mulf %25, %24 : vector<32x8xf32>
    %cst_18 = arith.constant 0.707106769 : f32
    %27 = vector.broadcast %cst_18 : f32 to vector<32x8xf32>
    %28 = arith.mulf %24, %27 : vector<32x8xf32>
    %29 = math.erf %28 : vector<32x8xf32>
    %cst_19 = arith.constant 1.000000e+00 : f32
    %30 = vector.broadcast %cst_19 : f32 to vector<32x8xf32>
    %31 = arith.addf %30, %29 : vector<32x8xf32>
    %32 = arith.mulf %26, %31 : vector<32x8xf32>
    %c0_20 = arith.constant 0 : index
    %c0_21 = arith.constant 0 : index
    %33 = vector.load %arg8[%c0_20, %c0_21] : memref<32x32xf32, #tpu.memory_space<vmem>>, vector<32x32xf32>
    %cst_22 = arith.constant dense<0.000000e+00> : vector<32x8xf32>
    %34 = tpu.matmul %33, %32, %cst_22 {dimension_numbers = #tpu.dot_dimension_numbers<[1], [0], [0], [1], [0, 0, 1, 1], [], []>} : vector<32x32xf32>, vector<32x8xf32>, vector<32x8xf32> -> vector<32x8xf32>
    %c0_23 = arith.constant 0 : index
    %c0_24 = arith.constant 0 : index
    %35 = vector.load %arg9[%c0_23, %c0_24] : memref<32x1xf32, #tpu.memory_space<vmem>>, vector<32x1xf32>
    %36 = vector.broadcast %35 : vector<32x1xf32> to vector<32x8xf32>
    %37 = arith.addf %34, %36 : vector<32x8xf32>
    %cst_25 = arith.constant 5.000000e-01 : f32
    %38 = vector.broadcast %cst_25 : f32 to vector<32x8xf32>
    %39 = arith.mulf %38, %37 : vector<32x8xf32>
    %cst_26 = arith.constant 0.707106769 : f32
    %40 = vector.broadcast %cst_26 : f32 to vector<32x8xf32>
    %41 = arith.mulf %37, %40 : vector<32x8xf32>
    %42 = math.erf %41 : vector<32x8xf32>
    %cst_27 = arith.constant 1.000000e+00 : f32
    %43 = vector.broadcast %cst_27 : f32 to vector<32x8xf32>
    %44 = arith.addf %43, %42 : vector<32x8xf32>
    %45 = arith.mulf %39, %44 : vector<32x8xf32>
    %c0_28 = arith.constant 0 : index
    %c0_29 = arith.constant 0 : index
    %46 = vector.load %arg10[%c0_28, %c0_29] : memref<2x32xf32, #tpu.memory_space<vmem>>, vector<2x32xf32>
    %cst_30 = arith.constant dense<0.000000e+00> : vector<2x8xf32>
    %47 = tpu.matmul %46, %45, %cst_30 {dimension_numbers = #tpu.dot_dimension_numbers<[1], [0], [0], [1], [0, 0, 1, 1], [], []>} : vector<2x32xf32>, vector<32x8xf32>, vector<2x8xf32> -> vector<2x8xf32>
    %c0_31 = arith.constant 0 : index
    %c0_32 = arith.constant 0 : index
    %48 = vector.load %arg11[%c0_31, %c0_32] : memref<2x1xf32, #tpu.memory_space<vmem>>, vector<2x1xf32>
    %49 = vector.broadcast %48 : vector<2x1xf32> to vector<2x8xf32>
    %50 = arith.addf %47, %49 : vector<2x8xf32>
    %c0_33 = arith.constant 0 : index
    %c0_34 = arith.constant 0 : index
    %51 = vector.load %arg12[%c0_33, %c0_34] : memref<2x8xf32, #tpu.memory_space<vmem>>, vector<2x8xf32>
    tpu.vector_store %arg12[%c0_33, %c0_34], %50 {strides = array<i32>} : memref<2x8xf32, #tpu.memory_space<vmem>>, vector<2x8xf32>,
    return
  }
  func.func @transform_0(%arg0: i32) -> (i32, i32) {
    %c0_i32 = arith.constant 0 : i32
    %c0_i32_0 = arith.constant 0 : i32
    return %c0_i32, %arg0 : i32, i32
  }
  func.func @transform_1(%arg0: i32) -> (i32, i32) {
    %c0_i32 = arith.constant 0 : i32
    %c0_i32_0 = arith.constant 0 : i32
    return %c0_i32, %arg0 : i32, i32
  }
  func.func @transform_2(%arg0: i32) -> (i32, i32) {
    %c0_i32 = arith.constant 0 : i32
    %c0_i32_0 = arith.constant 0 : i32
    %c0_i32_1 = arith.constant 0 : i32
    return %c0_i32, %c0_i32_0 : i32, i32
  }
  func.func @transform_3(%arg0: i32) -> (i32, i32) {
    %c0_i32 = arith.constant 0 : i32
    %c0_i32_0 = arith.constant 0 : i32
    %c0_i32_1 = arith.constant 0 : i32
    return %c0_i32, %c0_i32_0 : i32, i32
  }
  func.func @transform_4(%arg0: i32) -> (i32, i32) {
    %c0_i32 = arith.constant 0 : i32
    %c0_i32_0 = arith.constant 0 : i32
    %c0_i32_1 = arith.constant 0 : i32
    return %c0_i32, %c0_i32_0 : i32, i32
  }
  func.func @transform_5(%arg0: i32) -> (i32, i32) {
    %c0_i32 = arith.constant 0 : i32
    %c0_i32_0 = arith.constant 0 : i32
    %c0_i32_1 = arith.constant 0 : i32
    return %c0_i32, %c0_i32_0 : i32, i32
  }
  func.func @transform_6(%arg0: i32) -> (i32, i32) {
    %c0_i32 = arith.constant 0 : i32
    %c0_i32_0 = arith.constant 0 : i32
    %c0_i32_1 = arith.constant 0 : i32
    return %c0_i32, %c0_i32_0 : i32, i32
  }
  func.func @transform_7(%arg0: i32) -> (i32, i32) {
    %c0_i32 = arith.constant 0 : i32
    %c0_i32_0 = arith.constant 0 : i32
    %c0_i32_1 = arith.constant 0 : i32
    return %c0_i32, %c0_i32_0 : i32, i32
  }
  func.func @transform_8(%arg0: i32) -> (i32, i32) {
    %c0_i32 = arith.constant 0 : i32
    %c0_i32_0 = arith.constant 0 : i32
    %c0_i32_1 = arith.constant 0 : i32
    return %c0_i32, %c0_i32_0 : i32, i32
  }
  func.func @transform_9(%arg0: i32) -> (i32, i32) {
    %c0_i32 = arith.constant 0 : i32
    %c0_i32_0 = arith.constant 0 : i32
    %c0_i32_1 = arith.constant 0 : i32
    return %c0_i32, %c0_i32_0 : i32, i32
  }
  func.func @transform_10(%arg0: i32) -> (i32, i32) {
    %c0_i32 = arith.constant 0 : i32
    %c0_i32_0 = arith.constant 0 : i32
    %c0_i32_1 = arith.constant 0 : i32
    return %c0_i32, %c0_i32_0 : i32, i32
  }
  func.func @transform_11(%arg0: i32) -> (i32, i32) {
    %c0_i32 = arith.constant 0 : i32
    %c0_i32_0 = arith.constant 0 : i32
    return %c0_i32, %arg0 : i32, i32
  }
}

</mosaic_0001>

<llo_original>
// kernel: flow_forward.1
$region0: #{flow_forward.1}
  #allocation0 [shape = 'u32[]', space=smem, size = 0x4, offset = 0x4, fixed_abs, tag = 'smem constant byte address 0x4 - core index']
  #allocation1 [shape = 'u32[72,128]{1,0:T(1,128)}', space=vmem, size = 0x9000, scoped, tag = 'internal scratch']
  %s0 = inlined_call_operand.vmem [shape: f32[1,8], index: 0, kind: input, shape index: {}]
  %s1 = inlined_call_operand.vmem [shape: f32[2,8], index: 1, kind: input, shape index: {}]
  %s2 = inlined_call_operand.vmem [shape: f32[32,1], index: 2, kind: input, shape index: {}]
  %s3 = inlined_call_operand.vmem [shape: f32[32,2], index: 3, kind: input, shape index: {}]
  %s4 = inlined_call_operand.vmem [shape: f32[32,1], index: 4, kind: input, shape index: {}]
  %s5 = inlined_call_operand.vmem [shape: f32[32,32], index: 5, kind: input, shape index: {}]
  %s6 = inlined_call_operand.vmem [shape: f32[32,1], index: 6, kind: input, shape index: {}]
  %s7 = inlined_call_operand.vmem [shape: f32[32,32], index: 7, kind: input, shape index: {}]
  %s8 = inlined_call_operand.vmem [shape: f32[32,1], index: 8, kind: input, shape index: {}]
  %s9 = inlined_call_operand.vmem [shape: f32[2,32], index: 9, kind: input, shape index: {}]
  %s10 = inlined_call_operand.vmem [shape: f32[2,1], index: 10, kind: input, shape index: {}]
  %s11 = inlined_call_operand.hbm [shape: f32[2,8], index: 11, kind: output, shape index: {}]
  %s12 = sld [smem:[#allocation0]]
  $region54: #{flow_forward.1} parent=0
    _
  %s14 = ssub.s32 1, %s12
  %s15 = scalar_select 0, %s14, %s12
  $region1: #{flow_forward.1} parent=0
    #allocation2 [shape = 'u8[1024]{0}', space=vmem, size = 0x400, scoped, tag = 'output window, operand 0, single buffered']
    #allocation3 [shape = 's32[1]{0}', space=sflag, size = 0x4, scoped, tag = 'scoped memory for flow_forward.1']
    %16 = vsyncpa [#allocation3], 0
    // Predicated region
    $region2: #{flow_forward.1} parent=1 // pred_check
      _
    $region3: #{flow_forward.1} parent=1 // pred_check_branch
      %18 = sbr.rel (0) target = $region5
    $region4: #{flow_forward.1} parent=1 // pred_region
      _
    $region5: #{flow_forward.1} parent=1 // pred_fallthru
      _
    // Predicated region
    $region6: #{flow_forward.1} parent=1 // pred_check
      _
    $region7: #{flow_forward.1} parent=1 // pred_check_branch
      %20 = sbr.rel (0) target = $region9
    $region8: #{flow_forward.1} parent=1 // pred_region
      _
    $region9: #{flow_forward.1} parent=1 // pred_fallthru
      _
    // Predicated region
    $region10: #{flow_forward.1} parent=1 // pred_check
      _
    $region11: #{flow_forward.1} parent=1 // pred_check_branch
      %22 = sbr.rel (0) target = $region13
    $region12: #{flow_forward.1} parent=1 // pred_region
      _
    $region13: #{flow_forward.1} parent=1 // pred_fallthru
      _
    // Predicated region
    $region14: #{flow_forward.1} parent=1 // pred_check
      _
    $region15: #{flow_forward.1} parent=1 // pred_check_branch
      %24 = sbr.rel (0) target = $region17
    $region16: #{flow_forward.1} parent=1 // pred_region
      _
    $region17: #{flow_forward.1} parent=1 // pred_fallthru
      _
    // Predicated region
    $region18: #{flow_forward.1} parent=1 // pred_check
      _
    $region19: #{flow_forward.1} parent=1 // pred_check_branch
      %26 = sbr.rel (0) target = $region21
    $region20: #{flow_forward.1} parent=1 // pred_region
      _
    $region21: #{flow_forward.1} parent=1 // pred_fallthru
      _
    // Predicated region
    $region22: #{flow_forward.1} parent=1 // pred_check
      _
    $region23: #{flow_forward.1} parent=1 // pred_check_branch
      %28 = sbr.rel (0) target = $region25
    $region24: #{flow_forward.1} parent=1 // pred_region
      _
    $region25: #{flow_forward.1} parent=1 // pred_fallthru
      _
    // Predicated region
    $region26: #{flow_forward.1} parent=1 // pred_check
      _
    $region27: #{flow_forward.1} parent=1 // pred_check_branch
      %30 = sbr.rel (0) target = $region29
    $region28: #{flow_forward.1} parent=1 // pred_region
      _
    $region29: #{flow_forward.1} parent=1 // pred_fallthru
      _
    // Predicated region
    $region30: #{flow_forward.1} parent=1 // pred_check
      _
    $region31: #{flow_forward.1} parent=1 // pred_check_branch
      %32 = sbr.rel (0) target = $region33
    $region32: #{flow_forward.1} parent=1 // pred_region
      _
    $region33: #{flow_forward.1} parent=1 // pred_fallthru
      _
    // Predicated region
    $region34: #{flow_forward.1} parent=1 // pred_check
      _
    $region35: #{flow_forward.1} parent=1 // pred_check_branch
      %34 = sbr.rel (0) target = $region37
    $region36: #{flow_forward.1} parent=1 // pred_region
      _
    $region37: #{flow_forward.1} parent=1 // pred_fallthru
      _
    // Predicated region
    $region38: #{flow_forward.1} parent=1 // pred_check
      _
    $region39: #{flow_forward.1} parent=1 // pred_check_branch
      %36 = sbr.rel (0) target = $region41
    $region40: #{flow_forward.1} parent=1 // pred_region
      _
    $region41: #{flow_forward.1} parent=1 // pred_fallthru
      _
    // Predicated region
    $region42: #{flow_forward.1} parent=1 // pred_check
      _
    $region43: #{flow_forward.1} parent=1 // pred_check_branch
      %38 = sbr.rel (0) target = $region45
    $region44: #{flow_forward.1} parent=1 // pred_region
      _
    $region45: #{flow_forward.1} parent=1 // pred_fallthru
      _
    %v39 = vld [vmem:[%s3] sm:$0xff]
    %v40 = vld [vmem:[%s3 + $0x8] sm:$0xff]
    %v41 = vld [vmem:[%s3 + $0x10] sm:$0xff]
    %v42 = vld [vmem:[%s3 + $0x18] sm:$0xff]
    %v43 = vld [vmem:[%s1] sm:$0x3]
    %v44 = vld [vmem:[%s2] sm:$0xff]
    %v45 = vld [vmem:[%s2 + $0x8] sm:$0xff]
    %v46 = vld [vmem:[%s2 + $0x10] sm:$0xff]
    %v47 = vld [vmem:[%s2 + $0x18] sm:$0xff]
    %v48 = vld [vmem:[%s0] sm:$0x1]
    %50 = vset.pattern.permute.xlu0 0
    %51 = vperm.xlu0 %50, %v44
    %v52 = vpop.permute.xlu0 %51
    %55 = vset.pattern.permute.xlu0 0
    %56 = vperm.xlu0 %55, %v45
    %v57 = vpop.permute.xlu0 %56
    %60 = vset.pattern.permute.xlu0 0
    %61 = vperm.xlu0 %60, %v46
    %v62 = vpop.permute.xlu0 %61
    %65 = vset.pattern.permute.xlu0 0
    %66 = vperm.xlu0 %65, %v47
    %v67 = vpop.permute.xlu0 %66
    %v70 = vperm.slane %v48, 0
    %v72 = vmul.f32 %v52, %v70
    %v73 = vmul.f32 %v57, %v70
    %v74 = vmul.f32 %v62, %v70
    %v75 = vmul.f32 %v67, %v70
    %vm76 = vcmask 15360
    %v78 = vsel %vm76, %v39, 0
    %v81 = vsel %vm76, %v40, 0
    %v84 = vsel %vm76, %v41, 0
    %v87 = vsel %vm76, %v42, 0
    %vm89 = vcmask 1041408
    %v91 = vsel %vm89, %v43, 0
    %93 = vmatpush.msra.mxu0 0.0
    %94 = vmatpush.msra.mxu0 0.0
    %95 = vmatpush.msra.mxu0 0.0
    %96 = vmatpush.msra.mxu0 0.0
    %97 = vmatpush.msra.mxu0 0.0
    %98 = vmatpush.msra.mxu0 0.0
    %99 = vmatpush.msra.mxu0 0.0
    %100 = vmatpush.msra.mxu0 0.0
    %101 = vmatpush.msra.mxu0 0.0
    %102 = vmatpush.msra.mxu0 0.0
    %103 = vmatpush.msra.mxu0 0.0
    %104 = vmatpush.msra.mxu0 0.0
    %105 = vmatpush.msra.mxu0 0.0
    %106 = vmatpush.msra.mxu0 0.0
    %107 = vmatpush.msra.mxu0 0.0
    %108 = vmatpush.msra.mxu0 %v91
    %109 = vmatmul.f32.gmra.mxu0 %v78
    %v110 = vpop.f32.mrf.mxu0
    %v111 = vadd.f32 %v72, %v110
    %112 = vmatmul.f32.gmra.mxu0 %v81
    %v113 = vpop.f32.mrf.mxu0
    %v114 = vadd.f32 %v73, %v113
    %115 = vmatmul.f32.gmra.mxu0 %v84
    %v116 = vpop.f32.mrf.mxu0
    %v117 = vadd.f32 %v74, %v116
    %118 = vmatmul.f32.gmra.mxu0 %v87
    %v119 = vpop.f32.mrf.mxu0
    %v120 = vadd.f32 %v75, %v119
    %121 = vdwg.mxu0
    %v122 = vld [vmem:[%s4] sm:$0xff]
    %v123 = vld [vmem:[%s4 + $0x8] sm:$0xff]
    %v124 = vld [vmem:[%s4 + $0x10] sm:$0xff]
    %v125 = vld [vmem:[%s4 + $0x18] sm:$0xff]
    %127 = vset.pattern.permute.xlu0 0
    %128 = vperm.xlu0 %127, %v122
    %v129 = vpop.permute.xlu0 %128
    %132 = vset.pattern.permute.xlu0 0
    %133 = vperm.xlu0 %132, %v123
    %v134 = vpop.permute.xlu0 %133
    %137 = vset.pattern.permute.xlu0 0
    %138 = vperm.xlu0 %137, %v124
    %v139 = vpop.permute.xlu0 %138
    %142 = vset.pattern.permute.xlu0 0
    %143 = vperm.xlu0 %142, %v125
    %v144 = vpop.permute.xlu0 %143
    %v146 = vadd.f32 %v111, %v129
    %v147 = vadd.f32 %v114, %v134
    %v148 = vadd.f32 %v117, %v139
    %v149 = vadd.f32 %v120, %v144
    %v150 = vmul.f32 %v146, 0.5
    %v151 = vmul.f32 %v147, 0.5
    %v152 = vmul.f32 %v148, 0.5
    %v153 = vmul.f32 %v149, 0.5
    %v154 = vmul.f32 %v146, 0.70710677
    %v155 = vmul.f32 %v147, 0.70710677
    %v156 = vmul.f32 %v148, 0.70710677
    %v157 = vmul.f32 %v149, 0.70710677
    %v158 = vmul.f32 %v154, %v154
    %v159 = vmin.f32 16.0, %v158
    %v160 = vmul.f32 %v159, 2.1237322e-06
    %v161 = vadd.f32 %v160, 0.00028619796
    %v162 = vmul.f32 %v159, %v161
    %v163 = vadd.f32 %v162, 0.0036580483
    %v164 = vmul.f32 %v159, %v163
    %v165 = vadd.f32 %v164, 0.05243302
    %v166 = vmul.f32 %v159, %v165
    %v167 = vadd.f32 %v166, 0.18741608
    %v168 = vmul.f32 %v159, %v167
    %v169 = vadd.f32 %v168, 1.1283791
    %v170 = vmul.f32 %v154, %v169
    %v171 = vmul.f32 %v159, 3.8918573e-05
    %v172 = vadd.f32 %v171, 0.001143296
    %v173 = vmul.f32 %v159, %v172
    %v174 = vadd.f32 %v173, 0.014752088
    %v175 = vmul.f32 %v159, %v174
    %v176 = vadd.f32 %v175, 0.112945676
    %v177 = vmul.f32 %v159, %v176
    %v178 = vadd.f32 %v177, 0.4994258
    %v179 = vmul.f32 %v159, %v178
    %v180 = vadd.f32 %v179, 1.0
    %v181 = vrcp.pop %v180
    %v182 = vmul.f32 %v180, %v181
    %v183 = vsub.f32 1.0, %v182
    %v184 = vmul.f32 %v181, %v183
    %v185 = vadd.f32 %v181, %v184
    %vm186 = vweird.f32 %v180
    %vm187 = vweird.f32 %v181
    %vm188 = vmor %vm186, %vm187
    %v189 = vsel %vm188, %v181, %v185
    %v190 = vand.u32 2147483647, %v180
    %vm191 = vcmp.eq.f32.partialorder %v190, 8.507059e+37
    %v192 = vand.u32 %v180, 2147483648
    %v193 = vor.u32 1.1754944e-38, %v192
    %v194 = vsel %vm191, %v193, %v189
    %v195 = vmul.f32 %v170, %v194
    %v196 = vmin.f32 %v195, 1.0
    %v197 = vmax.f32 %v196, -1.0
    %v198 = vmul.f32 %v155, %v155
    %v199 = vmin.f32 16.0, %v198
    %v200 = vmul.f32 %v199, 2.1237322e-06
    %v201 = vadd.f32 %v200, 0.00028619796
    %v202 = vmul.f32 %v199, %v201
    %v203 = vadd.f32 %v202, 0.0036580483
    %v204 = vmul.f32 %v199, %v203
    %v205 = vadd.f32 %v204, 0.05243302
    %v206 = vmul.f32 %v199, %v205
    %v207 = vadd.f32 %v206, 0.18741608
    %v208 = vmul.f32 %v199, %v207
    %v209 = vadd.f32 %v208, 1.1283791
    %v210 = vmul.f32 %v155, %v209
    %v211 = vmul.f32 %v199, 3.8918573e-05
    %v212 = vadd.f32 %v211, 0.001143296
    %v213 = vmul.f32 %v199, %v212
    %v214 = vadd.f32 %v213, 0.014752088
    %v215 = vmul.f32 %v199, %v214
    %v216 = vadd.f32 %v215, 0.112945676
    %v217 = vmul.f32 %v199, %v216
    %v218 = vadd.f32 %v217, 0.4994258
    %v219 = vmul.f32 %v199, %v218
    %v220 = vadd.f32 %v219, 1.0
    %v221 = vrcp.pop %v220
    %v222 = vmul.f32 %v220, %v221
    %v223 = vsub.f32 1.0, %v222
    %v224 = vmul.f32 %v221, %v223
    %v225 = vadd.f32 %v221, %v224
    %vm226 = vweird.f32 %v220
    %vm227 = vweird.f32 %v221
    %vm228 = vmor %vm226, %vm227
    %v229 = vsel %vm228, %v221, %v225
    %v230 = vand.u32 2147483647, %v220
    %vm231 = vcmp.eq.f32.partialorder %v230, 8.507059e+37
    %v232 = vand.u32 %v220, 2147483648
    %v233 = vor.u32 1.1754944e-38, %v232
    %v234 = vsel %vm231, %v233, %v229
    %v235 = vmul.f32 %v210, %v234
    %v236 = vmin.f32 %v235, 1.0
    %v237 = vmax.f32 %v236, -1.0
    %v238 = vmul.f32 %v156, %v156
    %v239 = vmin.f32 16.0, %v238
    %v240 = vmul.f32 %v239, 2.1237322e-06
    %v241 = vadd.f32 %v240, 0.00028619796
    %v242 = vmul.f32 %v239, %v241
    %v243 = vadd.f32 %v242, 0.0036580483
    %v244 = vmul.f32 %v239, %v243
    %v245 = vadd.f32 %v244, 0.05243302
    %v246 = vmul.f32 %v239, %v245
    %v247 = vadd.f32 %v246, 0.18741608
    %v248 = vmul.f32 %v239, %v247
    %v249 = vadd.f32 %v248, 1.1283791
    %v250 = vmul.f32 %v156, %v249
    %v251 = vmul.f32 %v239, 3.8918573e-05
    %v252 = vadd.f32 %v251, 0.001143296
    %v253 = vmul.f32 %v239, %v252
    %v254 = vadd.f32 %v253, 0.014752088
    %v255 = vmul.f32 %v239, %v254
    %v256 = vadd.f32 %v255, 0.112945676
    %v257 = vmul.f32 %v239, %v256
    %v258 = vadd.f32 %v257, 0.4994258
    %v259 = vmul.f32 %v239, %v258
    %v260 = vadd.f32 %v259, 1.0
    %v261 = vrcp.pop %v260
    %v262 = vmul.f32 %v260, %v261
    %v263 = vsub.f32 1.0, %v262
    %v264 = vmul.f32 %v261, %v263
    %v265 = vadd.f32 %v261, %v264
    %vm266 = vweird.f32 %v260
    %vm267 = vweird.f32 %v261
    %vm268 = vmor %vm266, %vm267
    %v269 = vsel %vm268, %v261, %v265
    %v270 = vand.u32 2147483647, %v260
    %vm271 = vcmp.eq.f32.partialorder %v270, 8.507059e+37
    %v272 = vand.u32 %v260, 2147483648
    %v273 = vor.u32 1.1754944e-38, %v272
    %v274 = vsel %vm271, %v273, %v269
    %v275 = vmul.f32 %v250, %v274
    %v276 = vmin.f32 %v275, 1.0
    %v277 = vmax.f32 %v276, -1.0
    %v278 = vmul.f32 %v157, %v157
    %v279 = vmin.f32 16.0, %v278
    %v280 = vmul.f32 %v279, 2.1237322e-06
    %v281 = vadd.f32 %v280, 0.00028619796
    %v282 = vmul.f32 %v279, %v281
    %v283 = vadd.f32 %v282, 0.0036580483
    %v284 = vmul.f32 %v279, %v283
    %v285 = vadd.f32 %v284, 0.05243302
    %v286 = vmul.f32 %v279, %v285
    %v287 = vadd.f32 %v286, 0.18741608
    %v288 = vmul.f32 %v279, %v287
    %v289 = vadd.f32 %v288, 1.1283791
    %v290 = vmul.f32 %v157, %v289
    %v291 = vmul.f32 %v279, 3.8918573e-05
    %v292 = vadd.f32 %v291, 0.001143296
    %v293 = vmul.f32 %v279, %v292
    %v294 = vadd.f32 %v293, 0.014752088
    %v295 = vmul.f32 %v279, %v294
    %v296 = vadd.f32 %v295, 0.112945676
    %v297 = vmul.f32 %v279, %v296
    %v298 = vadd.f32 %v297, 0.4994258
    %v299 = vmul.f32 %v279, %v298
    %v300 = vadd.f32 %v299, 1.0
    %v301 = vrcp.pop %v300
    %v302 = vmul.f32 %v300, %v301
    %v303 = vsub.f32 1.0, %v302
    %v304 = vmul.f32 %v301, %v303
    %v305 = vadd.f32 %v301, %v304
    %vm306 = vweird.f32 %v300
    %vm307 = vweird.f32 %v301
    %vm308 = vmor %vm306, %vm307
    %v309 = vsel %vm308, %v301, %v305
    %v310 = vand.u32 2147483647, %v300
    %vm311 = vcmp.eq.f32.partialorder %v310, 8.507059e+37
    %v312 = vand.u32 %v300, 2147483648
    %v313 = vor.u32 1.1754944e-38, %v312
    %v314 = vsel %vm311, %v313, %v309
    %v315 = vmul.f32 %v290, %v314
    %v316 = vmin.f32 %v315, 1.0
    %v317 = vmax.f32 %v316, -1.0
    %v318 = vadd.f32 %v197, 1.0
    %v319 = vadd.f32 %v237, 1.0
    %v320 = vadd.f32 %v277, 1.0
    %v321 = vadd.f32 %v317, 1.0
    %v322 = vmul.f32 %v150, %v318
    %v323 = vmul.f32 %v151, %v319
    %v324 = vmul.f32 %v152, %v320
    %v325 = vmul.f32 %v153, %v321
    %v326 = vld [vmem:[%s5] sm:$0xff]
    %v327 = vld [vmem:[%s5 + $0x8] sm:$0xff]
    %v328 = vld [vmem:[%s5 + $0x10] sm:$0xff]
    %v329 = vld [vmem:[%s5 + $0x18] sm:$0xff]
    %v330 = vld [vmem:[%s6] sm:$0xff]
    %v331 = vld [vmem:[%s6 + $0x8] sm:$0xff]
    %v332 = vld [vmem:[%s6 + $0x10] sm:$0xff]
    %v333 = vld [vmem:[%s6 + $0x18] sm:$0xff]
    %335 = vset.pattern.permute.xlu0 0
    %336 = vperm.xlu0 %335, %v330
    %v337 = vpop.permute.xlu0 %336
    %340 = vset.pattern.permute.xlu0 0
    %341 = vperm.xlu0 %340, %v331
    %v342 = vpop.permute.xlu0 %341
    %345 = vset.pattern.permute.xlu0 0
    %346 = vperm.xlu0 %345, %v332
    %v347 = vpop.permute.xlu0 %346
    %350 = vset.pattern.permute.xlu0 0
    %351 = vperm.xlu0 %350, %v333
    %v352 = vpop.permute.xlu0 %351
    %vm354 = vcmask 261120
    %v356 = vsel %vm354, %v326, 0
    %v359 = vsel %vm354, %v327, 0
    %v362 = vsel %vm354, %v328, 0
    %v365 = vsel %vm354, %v329, 0
    %367 = vmatpush.msra.mxu0 0.0
    %368 = vmatpush.msra.mxu0 0.0
    %369 = vmatpush.msra.mxu0 0.0
    %370 = vmatpush.msra.mxu0 0.0
    %371 = vmatpush.msra.mxu0 0.0
    %372 = vmatpush.msra.mxu0 0.0
    %373 = vmatpush.msra.mxu0 0.0
    %374 = vmatpush.msra.mxu0 0.0
    %375 = vmatpush.msra.mxu0 0.0
    %376 = vmatpush.msra.mxu0 0.0
    %377 = vmatpush.msra.mxu0 0.0
    %378 = vmatpush.msra.mxu0 0.0
    %379 = vmatpush.msra.mxu0 %v325
    %380 = vmatpush.msra.mxu0 %v324
    %381 = vmatpush.msra.mxu0 %v323
    %382 = vmatpush.msra.mxu0 %v322
    %383 = vmatmul.f32.gmra.mxu0 %v356
    %v384 = vpop.f32.mrf.mxu0
    %v385 = vadd.f32 %v337, %v384
    %386 = vmatmul.f32.gmra.mxu0 %v359
    %v387 = vpop.f32.mrf.mxu0
    %v388 = vadd.f32 %v342, %v387
    %389 = vmatmul.f32.gmra.mxu0 %v362
    %v390 = vpop.f32.mrf.mxu0
    %v391 = vadd.f32 %v347, %v390
    %392 = vmatmul.f32.gmra.mxu0 %v365
    %v393 = vpop.f32.mrf.mxu0
    %v394 = vadd.f32 %v352, %v393
    %395 = vdwg.mxu0
    %v396 = vmul.f32 %v385, 0.5
    %v397 = vmul.f32 %v388, 0.5
    %v398 = vmul.f32 %v391, 0.5
    %v399 = vmul.f32 %v394, 0.5
    %v400 = vmul.f32 %v385, 0.70710677
    %v401 = vmul.f32 %v388, 0.70710677
    %v402 = vmul.f32 %v391, 0.70710677
    %v403 = vmul.f32 %v394, 0.70710677
    %v404 = vmul.f32 %v400, %v400
    %v405 = vmin.f32 16.0, %v404
    %v406 = vmul.f32 %v405, 2.1237322e-06
    %v407 = vadd.f32 %v406, 0.00028619796
    %v408 = vmul.f32 %v405, %v407
    %v409 = vadd.f32 %v408, 0.0036580483
    %v410 = vmul.f32 %v405, %v409
    %v411 = vadd.f32 %v410, 0.05243302
    %v412 = vmul.f32 %v405, %v411
    %v413 = vadd.f32 %v412, 0.18741608
    %v414 = vmul.f32 %v405, %v413
    %v415 = vadd.f32 %v414, 1.1283791
    %v416 = vmul.f32 %v400, %v415
    %v417 = vmul.f32 %v405, 3.8918573e-05
    %v418 = vadd.f32 %v417, 0.001143296
    %v419 = vmul.f32 %v405, %v418
    %v420 = vadd.f32 %v419, 0.014752088
    %v421 = vmul.f32 %v405, %v420
    %v422 = vadd.f32 %v421, 0.112945676
    %v423 = vmul.f32 %v405, %v422
    %v424 = vadd.f32 %v423, 0.4994258
    %v425 = vmul.f32 %v405, %v424
    %v426 = vadd.f32 %v425, 1.0
    %v427 = vrcp.pop %v426
    %v428 = vmul.f32 %v426, %v427
    %v429 = vsub.f32 1.0, %v428
    %v430 = vmul.f32 %v427, %v429
    %v431 = vadd.f32 %v427, %v430
    %vm432 = vweird.f32 %v426
    %vm433 = vweird.f32 %v427
    %vm434 = vmor %vm432, %vm433
    %v435 = vsel %vm434, %v427, %v431
    %v436 = vand.u32 2147483647, %v426
    %vm437 = vcmp.eq.f32.partialorder %v436, 8.507059e+37
    %v438 = vand.u32 %v426, 2147483648
    %v439 = vor.u32 1.1754944e-38, %v438
    %v440 = vsel %vm437, %v439, %v435
    %v441 = vmul.f32 %v416, %v440
    %v442 = vmin.f32 %v441, 1.0
    %v443 = vmax.f32 %v442, -1.0
    %v444 = vmul.f32 %v401, %v401
    %v445 = vmin.f32 16.0, %v444
    %v446 = vmul.f32 %v445, 2.1237322e-06
    %v447 = vadd.f32 %v446, 0.00028619796
    %v448 = vmul.f32 %v445, %v447
    %v449 = vadd.f32 %v448, 0.0036580483
    %v450 = vmul.f32 %v445, %v449
    %v451 = vadd.f32 %v450, 0.05243302
    %v452 = vmul.f32 %v445, %v451
    %v453 = vadd.f32 %v452, 0.18741608
    %v454 = vmul.f32 %v445, %v453
    %v455 = vadd.f32 %v454, 1.1283791
    %v456 = vmul.f32 %v401, %v455
    %v457 = vmul.f32 %v445, 3.8918573e-05
    %v458 = vadd.f32 %v457, 0.001143296
    %v459 = vmul.f32 %v445, %v458
    %v460 = vadd.f32 %v459, 0.014752088
    %v461 = vmul.f32 %v445, %v460
    %v462 = vadd.f32 %v461, 0.112945676
    %v463 = vmul.f32 %v445, %v462
    %v464 = vadd.f32 %v463, 0.4994258
    %v465 = vmul.f32 %v445, %v464
    %v466 = vadd.f32 %v465, 1.0
    %v467 = vrcp.pop %v466
    %v468 = vmul.f32 %v466, %v467
    %v469 = vsub.f32 1.0, %v468
    %v470 = vmul.f32 %v467, %v469
    %v471 = vadd.f32 %v467, %v470
    %vm472 = vweird.f32 %v466
    %vm473 = vweird.f32 %v467
    %vm474 = vmor %vm472, %vm473
    %v475 = vsel %vm474, %v467, %v471
    %v476 = vand.u32 2147483647, %v466
    %vm477 = vcmp.eq.f32.partialorder %v476, 8.507059e+37
    %v478 = vand.u32 %v466, 2147483648
    %v479 = vor.u32 1.1754944e-38, %v478
    %v480 = vsel %vm477, %v479, %v475
    %v481 = vmul.f32 %v456, %v480
    %v482 = vmin.f32 %v481, 1.0
    %v483 = vmax.f32 %v482, -1.0
    %v484 = vmul.f32 %v402, %v402
    %v485 = vmin.f32 16.0, %v484
    %v486 = vmul.f32 %v485, 2.1237322e-06
    %v487 = vadd.f32 %v486, 0.00028619796
    %v488 = vmul.f32 %v485, %v487
    %v489 = vadd.f32 %v488, 0.0036580483
    %v490 = vmul.f32 %v485, %v489
    %v491 = vadd.f32 %v490, 0.05243302
    %v492 = vmul.f32 %v485, %v491
    %v493 = vadd.f32 %v492, 0.18741608
    %v494 = vmul.f32 %v485, %v493
    %v495 = vadd.f32 %v494, 1.1283791
    %v496 = vmul.f32 %v402, %v495
    %v497 = vmul.f32 %v485, 3.8918573e-05
    %v498 = vadd.f32 %v497, 0.001143296
    %v499 = vmul.f32 %v485, %v498
    %v500 = vadd.f32 %v499, 0.014752088
    %v501 = vmul.f32 %v485, %v500
    %v502 = vadd.f32 %v501, 0.112945676
    %v503 = vmul.f32 %v485, %v502
    %v504 = vadd.f32 %v503, 0.4994258
    %v505 = vmul.f32 %v485, %v504
    %v506 = vadd.f32 %v505, 1.0
    %v507 = vrcp.pop %v506
    %v508 = vmul.f32 %v506, %v507
    %v509 = vsub.f32 1.0, %v508
    %v510 = vmul.f32 %v507, %v509
    %v511 = vadd.f32 %v507, %v510
    %vm512 = vweird.f32 %v506
    %vm513 = vweird.f32 %v507
    %vm514 = vmor %vm512, %vm513
    %v515 = vsel %vm514, %v507, %v511
    %v516 = vand.u32 2147483647, %v506
    %vm517 = vcmp.eq.f32.partialorder %v516, 8.507059e+37
    %v518 = vand.u32 %v506, 2147483648
    %v519 = vor.u32 1.1754944e-38, %v518
    %v520 = vsel %vm517, %v519, %v515
    %v521 = vmul.f32 %v496, %v520
    %v522 = vmin.f32 %v521, 1.0
    %v523 = vmax.f32 %v522, -1.0
    %v524 = vmul.f32 %v403, %v403
    %v525 = vmin.f32 16.0, %v524
    %v526 = vmul.f32 %v525, 2.1237322e-06
    %v527 = vadd.f32 %v526, 0.00028619796
    %v528 = vmul.f32 %v525, %v527
    %v529 = vadd.f32 %v528, 0.0036580483
    %v530 = vmul.f32 %v525, %v529
    %v531 = vadd.f32 %v530, 0.05243302
    %v532 = vmul.f32 %v525, %v531
    %v533 = vadd.f32 %v532, 0.18741608
    %v534 = vmul.f32 %v525, %v533
    %v535 = vadd.f32 %v534, 1.1283791
    %v536 = vmul.f32 %v403, %v535
    %v537 = vmul.f32 %v525, 3.8918573e-05
    %v538 = vadd.f32 %v537, 0.001143296
    %v539 = vmul.f32 %v525, %v538
    %v540 = vadd.f32 %v539, 0.014752088
    %v541 = vmul.f32 %v525, %v540
    %v542 = vadd.f32 %v541, 0.112945676
    %v543 = vmul.f32 %v525, %v542
    %v544 = vadd.f32 %v543, 0.4994258
    %v545 = vmul.f32 %v525, %v544
    %v546 = vadd.f32 %v545, 1.0
    %v547 = vrcp.pop %v546
    %v548 = vmul.f32 %v546, %v547
    %v549 = vsub.f32 1.0, %v548
    %v550 = vmul.f32 %v547, %v549
    %v551 = vadd.f32 %v547, %v550
    %vm552 = vweird.f32 %v546
    %vm553 = vweird.f32 %v547
    %vm554 = vmor %vm552, %vm553
    %v555 = vsel %vm554, %v547, %v551
    %v556 = vand.u32 2147483647, %v546
    %vm557 = vcmp.eq.f32.partialorder %v556, 8.507059e+37
    %v558 = vand.u32 %v546, 2147483648
    %v559 = vor.u32 1.1754944e-38, %v558
    %v560 = vsel %vm557, %v559, %v555
    %v561 = vmul.f32 %v536, %v560
    %v562 = vmin.f32 %v561, 1.0
    %v563 = vmax.f32 %v562, -1.0
    %v564 = vadd.f32 %v443, 1.0
    %v565 = vadd.f32 %v483, 1.0
    %v566 = vadd.f32 %v523, 1.0
    %v567 = vadd.f32 %v563, 1.0
    %v568 = vmul.f32 %v396, %v564
    %v569 = vmul.f32 %v397, %v565
    %v570 = vmul.f32 %v398, %v566
    %v571 = vmul.f32 %v399, %v567
    %v572 = vld [vmem:[%s7] sm:$0xff]
    %v573 = vld [vmem:[%s7 + $0x8] sm:$0xff]
    %v574 = vld [vmem:[%s7 + $0x10] sm:$0xff]
    %v575 = vld [vmem:[%s7 + $0x18] sm:$0xff]
    %v576 = vld [vmem:[%s8] sm:$0xff]
    %v577 = vld [vmem:[%s8 + $0x8] sm:$0xff]
    %v578 = vld [vmem:[%s8 + $0x10] sm:$0xff]
    %v579 = vld [vmem:[%s8 + $0x18] sm:$0xff]
    %581 = vset.pattern.permute.xlu0 0
    %582 = vperm.xlu0 %581, %v576
    %v583 = vpop.permute.xlu0 %582
    %586 = vset.pattern.permute.xlu0 0
    %587 = vperm.xlu0 %586, %v577
    %v588 = vpop.permute.xlu0 %587
    %591 = vset.pattern.permute.xlu0 0
    %592 = vperm.xlu0 %591, %v578
    %v593 = vpop.permute.xlu0 %592
    %596 = vset.pattern.permute.xlu0 0
    %597 = vperm.xlu0 %596, %v579
    %v598 = vpop.permute.xlu0 %597
    %v601 = vsel %vm354, %v572, 0
    %v604 = vsel %vm354, %v573, 0
    %v607 = vsel %vm354, %v574, 0
    %v610 = vsel %vm354, %v575, 0
    %612 = vmatpush.msra.mxu0 0.0
    %613 = vmatpush.msra.mxu0 0.0
    %614 = vmatpush.msra.mxu0 0.0
    %615 = vmatpush.msra.mxu0 0.0
    %616 = vmatpush.msra.mxu0 0.0
    %617 = vmatpush.msra.mxu0 0.0
    %618 = vmatpush.msra.mxu0 0.0
    %619 = vmatpush.msra.mxu0 0.0
    %620 = vmatpush.msra.mxu0 0.0
    %621 = vmatpush.msra.mxu0 0.0
    %622 = vmatpush.msra.mxu0 0.0
    %623 = vmatpush.msra.mxu0 0.0
    %624 = vmatpush.msra.mxu0 %v571
    %625 = vmatpush.msra.mxu0 %v570
    %626 = vmatpush.msra.mxu0 %v569
    %627 = vmatpush.msra.mxu0 %v568
    %628 = vmatmul.f32.gmra.mxu0 %v601
    %v629 = vpop.f32.mrf.mxu0
    %v630 = vadd.f32 %v583, %v629
    %631 = vmatmul.f32.gmra.mxu0 %v604
    %v632 = vpop.f32.mrf.mxu0
    %v633 = vadd.f32 %v588, %v632
    %634 = vmatmul.f32.gmra.mxu0 %v607
    %v635 = vpop.f32.mrf.mxu0
    %v636 = vadd.f32 %v593, %v635
    %637 = vmatmul.f32.gmra.mxu0 %v610
    %v638 = vpop.f32.mrf.mxu0
    %v639 = vadd.f32 %v598, %v638
    %640 = vdwg.mxu0
    %v641 = vmul.f32 %v630, 0.5
    %v642 = vmul.f32 %v633, 0.5
    %v643 = vmul.f32 %v636, 0.5
    %v644 = vmul.f32 %v639, 0.5
    %v645 = vmul.f32 %v630, 0.70710677
    %v646 = vmul.f32 %v633, 0.70710677
    %v647 = vmul.f32 %v636, 0.70710677
    %v648 = vmul.f32 %v639, 0.70710677
    %v649 = vmul.f32 %v645, %v645
    %v650 = vmin.f32 16.0, %v649
    %v651 = vmul.f32 %v650, 2.1237322e-06
    %v652 = vadd.f32 %v651, 0.00028619796
    %v653 = vmul.f32 %v650, %v652
    %v654 = vadd.f32 %v653, 0.0036580483
    %v655 = vmul.f32 %v650, %v654
    %v656 = vadd.f32 %v655, 0.05243302
    %v657 = vmul.f32 %v650, %v656
    %v658 = vadd.f32 %v657, 0.18741608
    %v659 = vmul.f32 %v650, %v658
    %v660 = vadd.f32 %v659, 1.1283791
    %v661 = vmul.f32 %v645, %v660
    %v662 = vmul.f32 %v650, 3.8918573e-05
    %v663 = vadd.f32 %v662, 0.001143296
    %v664 = vmul.f32 %v650, %v663
    %v665 = vadd.f32 %v664, 0.014752088
    %v666 = vmul.f32 %v650, %v665
    %v667 = vadd.f32 %v666, 0.112945676
    %v668 = vmul.f32 %v650, %v667
    %v669 = vadd.f32 %v668, 0.4994258
    %v670 = vmul.f32 %v650, %v669
    %v671 = vadd.f32 %v670, 1.0
    %v672 = vrcp.pop %v671
    %v673 = vmul.f32 %v671, %v672
    %v674 = vsub.f32 1.0, %v673
    %v675 = vmul.f32 %v672, %v674
    %v676 = vadd.f32 %v672, %v675
    %vm677 = vweird.f32 %v671
    %vm678 = vweird.f32 %v672
    %vm679 = vmor %vm677, %vm678
    %v680 = vsel %vm679, %v672, %v676
    %v681 = vand.u32 2147483647, %v671
    %vm682 = vcmp.eq.f32.partialorder %v681, 8.507059e+37
    %v683 = vand.u32 %v671, 2147483648
    %v684 = vor.u32 1.1754944e-38, %v683
    %v685 = vsel %vm682, %v684, %v680
    %v686 = vmul.f32 %v661, %v685
    %v687 = vmin.f32 %v686, 1.0
    %v688 = vmax.f32 %v687, -1.0
    %v689 = vmul.f32 %v646, %v646
    %v690 = vmin.f32 16.0, %v689
    %v691 = vmul.f32 %v690, 2.1237322e-06
    %v692 = vadd.f32 %v691, 0.00028619796
    %v693 = vmul.f32 %v690, %v692
    %v694 = vadd.f32 %v693, 0.0036580483
    %v695 = vmul.f32 %v690, %v694
    %v696 = vadd.f32 %v695, 0.05243302
    %v697 = vmul.f32 %v690, %v696
    %v698 = vadd.f32 %v697, 0.18741608
    %v699 = vmul.f32 %v690, %v698
    %v700 = vadd.f32 %v699, 1.1283791
    %v701 = vmul.f32 %v646, %v700
    %v702 = vmul.f32 %v690, 3.8918573e-05
    %v703 = vadd.f32 %v702, 0.001143296
    %v704 = vmul.f32 %v690, %v703
    %v705 = vadd.f32 %v704, 0.014752088
    %v706 = vmul.f32 %v690, %v705
    %v707 = vadd.f32 %v706, 0.112945676
    %v708 = vmul.f32 %v690, %v707
    %v709 = vadd.f32 %v708, 0.4994258
    %v710 = vmul.f32 %v690, %v709
    %v711 = vadd.f32 %v710, 1.0
    %v712 = vrcp.pop %v711
    %v713 = vmul.f32 %v711, %v712
    %v714 = vsub.f32 1.0, %v713
    %v715 = vmul.f32 %v712, %v714
    %v716 = vadd.f32 %v712, %v715
    %vm717 = vweird.f32 %v711
    %vm718 = vweird.f32 %v712
    %vm719 = vmor %vm717, %vm718
    %v720 = vsel %vm719, %v712, %v716
    %v721 = vand.u32 2147483647, %v711
    %vm722 = vcmp.eq.f32.partialorder %v721, 8.507059e+37
    %v723 = vand.u32 %v711, 2147483648
    %v724 = vor.u32 1.1754944e-38, %v723
    %v725 = vsel %vm722, %v724, %v720
    %v726 = vmul.f32 %v701, %v725
    %v727 = vmin.f32 %v726, 1.0
    %v728 = vmax.f32 %v727, -1.0
    %v729 = vmul.f32 %v647, %v647
    %v730 = vmin.f32 16.0, %v729
    %v731 = vmul.f32 %v730, 2.1237322e-06
    %v732 = vadd.f32 %v731, 0.00028619796
    %v733 = vmul.f32 %v730, %v732
    %v734 = vadd.f32 %v733, 0.0036580483
    %v735 = vmul.f32 %v730, %v734
    %v736 = vadd.f32 %v735, 0.05243302
    %v737 = vmul.f32 %v730, %v736
    %v738 = vadd.f32 %v737, 0.18741608
    %v739 = vmul.f32 %v730, %v738
    %v740 = vadd.f32 %v739, 1.1283791
    %v741 = vmul.f32 %v647, %v740
    %v742 = vmul.f32 %v730, 3.8918573e-05
    %v743 = vadd.f32 %v742, 0.001143296
    %v744 = vmul.f32 %v730, %v743
    %v745 = vadd.f32 %v744, 0.014752088
    %v746 = vmul.f32 %v730, %v745
    %v747 = vadd.f32 %v746, 0.112945676
    %v748 = vmul.f32 %v730, %v747
    %v749 = vadd.f32 %v748, 0.4994258
    %v750 = vmul.f32 %v730, %v749
    %v751 = vadd.f32 %v750, 1.0
    %v752 = vrcp.pop %v751
    %v753 = vmul.f32 %v751, %v752
    %v754 = vsub.f32 1.0, %v753
    %v755 = vmul.f32 %v752, %v754
    %v756 = vadd.f32 %v752, %v755
    %vm757 = vweird.f32 %v751
    %vm758 = vweird.f32 %v752
    %vm759 = vmor %vm757, %vm758
    %v760 = vsel %vm759, %v752, %v756
    %v761 = vand.u32 2147483647, %v751
    %vm762 = vcmp.eq.f32.partialorder %v761, 8.507059e+37
    %v763 = vand.u32 %v751, 2147483648
    %v764 = vor.u32 1.1754944e-38, %v763
    %v765 = vsel %vm762, %v764, %v760
    %v766 = vmul.f32 %v741, %v765
    %v767 = vmin.f32 %v766, 1.0
    %v768 = vmax.f32 %v767, -1.0
    %v769 = vmul.f32 %v648, %v648
    %v770 = vmin.f32 16.0, %v769
    %v771 = vmul.f32 %v770, 2.1237322e-06
    %v772 = vadd.f32 %v771, 0.00028619796
    %v773 = vmul.f32 %v770, %v772
    %v774 = vadd.f32 %v773, 0.0036580483
    %v775 = vmul.f32 %v770, %v774
    %v776 = vadd.f32 %v775, 0.05243302
    %v777 = vmul.f32 %v770, %v776
    %v778 = vadd.f32 %v777, 0.18741608
    %v779 = vmul.f32 %v770, %v778
    %v780 = vadd.f32 %v779, 1.1283791
    %v781 = vmul.f32 %v648, %v780
    %v782 = vmul.f32 %v770, 3.8918573e-05
    %v783 = vadd.f32 %v782, 0.001143296
    %v784 = vmul.f32 %v770, %v783
    %v785 = vadd.f32 %v784, 0.014752088
    %v786 = vmul.f32 %v770, %v785
    %v787 = vadd.f32 %v786, 0.112945676
    %v788 = vmul.f32 %v770, %v787
    %v789 = vadd.f32 %v788, 0.4994258
    %v790 = vmul.f32 %v770, %v789
    %v791 = vadd.f32 %v790, 1.0
    %v792 = vrcp.pop %v791
    %v793 = vmul.f32 %v791, %v792
    %v794 = vsub.f32 1.0, %v793
    %v795 = vmul.f32 %v792, %v794
    %v796 = vadd.f32 %v792, %v795
    %vm797 = vweird.f32 %v791
    %vm798 = vweird.f32 %v792
    %vm799 = vmor %vm797, %vm798
    %v800 = vsel %vm799, %v792, %v796
    %v801 = vand.u32 2147483647, %v791
    %vm802 = vcmp.eq.f32.partialorder %v801, 8.507059e+37
    %v803 = vand.u32 %v791, 2147483648
    %v804 = vor.u32 1.1754944e-38, %v803
    %v805 = vsel %vm802, %v804, %v800
    %v806 = vmul.f32 %v781, %v805
    %v807 = vmin.f32 %v806, 1.0
    %v808 = vmax.f32 %v807, -1.0
    %v809 = vadd.f32 %v688, 1.0
    %v810 = vadd.f32 %v728, 1.0
    %v811 = vadd.f32 %v768, 1.0
    %v812 = vadd.f32 %v808, 1.0
    %v813 = vmul.f32 %v641, %v809
    %v814 = vmul.f32 %v642, %v810
    %v815 = vmul.f32 %v643, %v811
    %v816 = vmul.f32 %v644, %v812
    %v817 = vld [vmem:[%s9] sm:$0x3]
    %v818 = vld [vmem:[%s10] sm:$0x3]
    %820 = vset.pattern.permute.xlu0 0
    %821 = vperm.xlu0 %820, %v818
    %v822 = vpop.permute.xlu0 %821
    %v825 = vsel %vm354, %v817, 0
    %827 = vmatpush.msra.mxu0 0.0
    %828 = vmatpush.msra.mxu0 0.0
    %829 = vmatpush.msra.mxu0 0.0
    %830 = vmatpush.msra.mxu0 0.0
    %831 = vmatpush.msra.mxu0 0.0
    %832 = vmatpush.msra.mxu0 0.0
    %833 = vmatpush.msra.mxu0 0.0
    %834 = vmatpush.msra.mxu0 0.0
    %835 = vmatpush.msra.mxu0 0.0
    %836 = vmatpush.msra.mxu0 0.0
    %837 = vmatpush.msra.mxu0 0.0
    %838 = vmatpush.msra.mxu0 0.0
    %839 = vmatpush.msra.mxu0 %v816
    %840 = vmatpush.msra.mxu0 %v815
    %841 = vmatpush.msra.mxu0 %v814
    %842 = vmatpush.msra.mxu0 %v813
    %843 = vmatmul.f32.gmra.mxu0 %v825
    %v844 = vpop.f32.mrf.mxu0
    %v845 = vadd.f32 %v822, %v844
    %846 = vdwg.mxu0
    %vm847 = vcmask 58368
    %848 = vst.msk [vmem:[#allocation2] sm:$0x3] %vm847, %v845
    // Predicated region
    $region46: #{flow_forward.1} parent=1 // pred_check
      _
    $region47: #{flow_forward.1} parent=1 // pred_check_branch
      %850 = sbr.rel (0) target = $region49
    $region48: #{flow_forward.1} parent=1 // pred_region
      %852 = vsyncadd [#allocation3], 0
      %s854 = sshll.u32 [#allocation2], 4
      %s855 = int_to_ptr.vmem [resolvable:$true] %s854
      %s856 = sshll.u32 %s11, 4
      %s857 = int_to_ptr.hbm [resolvable:$true] %s856
      %859 = dma.vmem_to_hbm [thread:$0]  %s855, 32, %s857, [#allocation3]
    $region49: #{flow_forward.1} parent=1 // pred_fallthru
      _
    // Predicated region
    $region50: #{flow_forward.1} parent=1 // pred_check
      _
    $region51: #{flow_forward.1} parent=1 // pred_check_branch
      %861 = sbr.rel (0) target = $region53
    $region52: #{flow_forward.1} parent=1 // pred_region
      %863 = dma.done [#allocation3], 32
    $region53: #{flow_forward.1} parent=1 // pred_fallthru
      _
    %864 = vsyncpa [#allocation3], 1

</llo_original>
